<compile_context>
chip_gen: v7x
topology: tpu7x:2x2x1
jax: 0.10.0
libtpu: 0.0.40
codegen_flags: <defaults>
</compile_context>

<pallas_src>
import math

import jax
import jax.numpy as jnp
from jax.experimental import pallas as pl
from jax.experimental.pallas import tpu as pltpu


# ---------------------------------------------------------------------------
# Hardware query (host-side, best-effort with safe fallbacks).
# ---------------------------------------------------------------------------
def _tpu_hw_info():
    """Returns (vmem_capacity_bytes, num_tensorcores_per_chip, bf16_flop_per_byte)."""
    vmem = 64 << 20          # conservative default (v7x per-TC VMEM)
    n_tc = 1
    balance_bf16 = 240.0     # conservative v5e-class bf16 flop/byte balance
    try:
        info = pltpu.get_tpu_info()
        vmem = int(getattr(info, "vmem_capacity_bytes", vmem))
    except Exception:
        pass
    kind = ""
    try:
        kind = jax.devices()[0].device_kind.lower()
    except Exception:
        pass
    if "v6" in kind:
        balance_bf16 = 650.0          # ~918 TF/s bf16 / ~1.4 TB/s HBM
    if "7" in kind:                   # v7x: 2 TCs per chip, 64 MiB VMEM per TC
        n_tc = 2
        vmem = min(vmem, 64 << 20)
        balance_bf16 = 600.0          # ~996 TF/s / ~1.6 TB/s per-TC HBM share
    return vmem, n_tc, balance_bf16


# ---------------------------------------------------------------------------
# Interpolation-matrix construction (host side, cheap glue).
# ---------------------------------------------------------------------------
def _interp_matrix(n_out: int, n_in: int) -> jnp.ndarray:
    """(n_out, n_in) 1-D linear-interpolation matrix, align_corners=True.

    Matches torch.nn.functional.interpolate(mode='bilinear', align_corners=True).
    """
    if n_in == 1 or n_out == 1:
        # align_corners with a single source/target pixel -> src coord is 0
        return jnp.zeros((n_out, n_in), jnp.float32).at[:, 0].set(1.0)
    out_idx = jnp.arange(n_out, dtype=jnp.float32)
    src = out_idx * (n_in - 1) / (n_out - 1)
    lo = jnp.clip(jnp.floor(src).astype(jnp.int32), 0, n_in - 2)
    frac = src - lo.astype(jnp.float32)
    oh_lo = jax.nn.one_hot(lo, n_in, dtype=jnp.float32)
    oh_hi = jax.nn.one_hot(lo + 1, n_in, dtype=jnp.float32)
    return (1.0 - frac)[:, None] * oh_lo + frac[:, None] * oh_hi


# ---------------------------------------------------------------------------
# Kernels.
# ---------------------------------------------------------------------------
def _up_fused_kernel(x_ref, w2t_ref, o_ref):
    """Fused path: one lane-dense matmul per channel block.

    x_ref:   (CB, H_in*W_in)
    w2t_ref: (H_in*W_in, H_out*W_out)   -- kron(Wh, Ww)^T
    o_ref:   (CB, H_out*W_out)
    """
    o_ref[...] = jnp.dot(
        x_ref[...], w2t_ref[...], preferred_element_type=jnp.float32
    ).astype(o_ref.dtype)


def _up_separable_kernel(x_ref, wh_ref, wwt_ref, o_ref):
    """Separable path: single large-M W-pass matmul + per-channel H pass.

    x_ref:   (CB, H_in, W_in)
    wh_ref:  (H_out, H_in)
    wwt_ref: (W_in, W_out)   -- pre-transposed Ww
    o_ref:   (CB, H_out, W_out)
    """
    cb, h_in, w_in = x_ref.shape
    w_out = wwt_ref.shape[1]
    wh = wh_ref[...]
    wwt = wwt_ref[...]
    sublane = 16 if x_ref.dtype == jnp.bfloat16 else 8

    if h_in % sublane == 0:
        # --- W pass: ONE large-M matmul over the whole channel block.
        #     Flatten (CB, H_in, W_in) -> (CB*H_in, W_in) is layout-free when
        #     H_in is sublane-aligned. ---
        xw = jnp.dot(x_ref[...].reshape(cb * h_in, w_in), wwt,
                     preferred_element_type=jnp.float32)
        xw = xw.reshape(cb, h_in, w_out).astype(wh.dtype)
        # --- H pass: one small matmul per channel (static unroll, CB bounded
        #     by the wrapper). ---
        for c in range(cb):
            o_ref[c] = jnp.dot(
                wh, xw[c], preferred_element_type=jnp.float32
            ).astype(o_ref.dtype)
    else:
        # Fallback (rare: H_in not sublane-aligned): per-channel separable.
        for c in range(cb):
            t = jnp.dot(wh, x_ref[c],
                        preferred_element_type=jnp.float32).astype(wwt.dtype)
            o_ref[c] = jnp.dot(
                t, wwt, preferred_element_type=jnp.float32
            ).astype(o_ref.dtype)


# ---------------------------------------------------------------------------
# Block-size selection helpers.
# ---------------------------------------------------------------------------
def _largest_divisor_leq(n: int, cap: int) -> int:
    cap = max(1, min(n, cap))
    for d in range(cap, 0, -1):
        if n % d == 0:
            return d
    return 1


def _pick_cb_fused(nc: int, cap: int, sublane: int, min_grid: int):
    """Channel block for the fused path.

    The second-minor block dim must be a multiple of the sublane count or the
    full extent.  Prefer grid length >= min_grid (2 only on multi-TC chips)."""
    best = None
    for d in range(max(1, min(nc, cap)), 0, -1):
        if nc % d:
            continue
        if d % sublane == 0 or d == nc:
            if nc // d >= min_grid:
                return d
            if best is None:
                best = d
    return best


# ---------------------------------------------------------------------------
# Wrapper (Up.forward equivalent).
# ---------------------------------------------------------------------------
def up_bilinear(x: jnp.ndarray, scale_factor, mode: str = "bilinear",
                align_corners: bool = True, *,
                _force_separable: bool = False,
                _force_fused: bool = False) -> jnp.ndarray:
    assert mode == "bilinear", "only bilinear mode implemented"
    assert align_corners, "only align_corners=True implemented"

    n, c, h_in, w_in = x.shape
    if isinstance(scale_factor, (tuple, list)):
        sf_h, sf_w = scale_factor
    else:
        sf_h = sf_w = scale_factor
    # PyTorch floors the output size for fractional scale factors.
    h_out = int(math.floor(h_in * sf_h))
    w_out = int(math.floor(w_in * sf_w))
    nc = n * c

    itemsize = jnp.dtype(x.dtype).itemsize
    is_bf16 = x.dtype == jnp.bfloat16
    # bf16 inputs -> bf16 MXU operands (f32 accumulation); otherwise f32 weights.
    w_dtype = jnp.bfloat16 if is_bf16 else jnp.float32
    w_itemsize = jnp.dtype(w_dtype).itemsize

    wh32 = _interp_matrix(h_out, h_in)          # (H_out, H_in), f32
    ww32 = _interp_matrix(w_out, w_in)          # (W_out, W_in), f32

    vmem_cap, n_tc, balance_bf16 = _tpu_hw_info()
    # Scoped-VMEM limit requested from Mosaic; leave headroom for internal scratch.
    vmem_limit = max(32 << 20, int(min(vmem_cap, 128 << 20) * 0.85))

    hi_wi = h_in * w_in
    ho_wo = h_out * w_out
    per_ch_bytes = (hi_wi + ho_wo) * itemsize

    # --------------- fused (kron) path decision: roofline + VMEM ---------------
    fused_w_bytes = hi_wi * ho_wo * w_itemsize
    # Arithmetic intensity of the fused matmul; weight stays resident and is
    # amortized over all channels, so bytes are just the in/out tile traffic.
    fused_intensity = 2.0 * hi_wi * ho_wo / float(per_ch_bytes)
    balance = balance_bf16 if is_bf16 else balance_bf16 / 4.0  # f32 MXU path slower
    intensity_budget = 0.5 * balance        # stay comfortably mem-bound
    if w_out % 128 != 0:
        # Separable-path stores would be masked (narrow/odd lane dim, ~4.5x
        # slower writeback) -> tolerate more redundant FLOPs to keep the
        # lane-dense fused output.
        intensity_budget *= 2.0

    use_fused = (fused_intensity <= intensity_budget
                 and 2 * fused_w_bytes <= vmem_limit // 3)
    if _force_fused:
        use_fused = 2 * fused_w_bytes <= vmem_limit // 2
    if _force_separable:
        use_fused = False

    cb = None
    if use_fused:
        sublane = 16 if is_bf16 else 8
        # VMEM footprint: 2x (in + out) tiles (double-buffered) + 2x weight
        # (weight double-buffering accounted for here instead of Buffered(1)).
        usable = vmem_limit - 2 * fused_w_bytes - (4 << 20)
        tile_cap = max(1, usable // (2 * per_ch_bytes))
        cb = _pick_cb_fused(nc, tile_cap, sublane, min_grid=n_tc)
        if cb is None:
            use_fused = False   # fall back to the general separable path

    if use_fused:
        grid = (nc // cb,)
        flops = 2 * nc * hi_wi * ho_wo
        bytes_accessed = nc * per_ch_bytes + fused_w_bytes
        cost = pl.CostEstimate(flops=int(flops), transcendentals=0,
                               bytes_accessed=int(bytes_accessed))

        x_flat = x.reshape(nc, hi_wi)                             # lane-dense input
        w2t = jnp.kron(wh32, ww32).T.astype(w_dtype)              # (HiWi, HoWo)

        out_flat = pl.pallas_call(
            _up_fused_kernel,
            out_shape=jax.ShapeDtypeStruct((nc, ho_wo), x.dtype),
            grid_spec=pltpu.PrefetchScalarGridSpec(
                num_scalar_prefetch=0,
                grid=grid,
                in_specs=[
                    pl.BlockSpec((cb, hi_wi), lambda i: (i, 0)),
                    pl.BlockSpec((hi_wi, ho_wo), lambda i: (0, 0)),
                ],
                out_specs=pl.BlockSpec((cb, ho_wo), lambda i: (i, 0)),
            ),
            compiler_params=pltpu.CompilerParams(
                dimension_semantics=("parallel",),
                vmem_limit_bytes=int(vmem_limit)),
            cost_estimate=cost,
        )(x_flat, w2t)
        return out_flat.reshape(n, c, h_out, w_out)

    # ---------------- general separable path ----------------
    sep_w_bytes = (wh32.size + ww32.size) * w_itemsize
    # Intermediate (cb*H_in, W_out) f32 of the W pass also lives in VMEM.
    per_ch_sep = per_ch_bytes + h_in * w_out * 4
    usable = vmem_limit - 2 * sep_w_bytes - (4 << 20)
    tile_cap = max(1, usable // (2 * per_ch_sep))
    cap = min(64, tile_cap)                  # 64 bounds the trace-time unroll
    if n_tc >= 2 and nc >= n_tc:
        cap = min(cap, max(1, nc // n_tc))   # keep >=2 grid steps only on multi-TC chips
    cb = _largest_divisor_leq(nc, cap)
    grid = (nc // cb,)

    flops = 2 * nc * (h_in * w_in * w_out + h_out * h_in * w_out)
    bytes_accessed = nc * per_ch_bytes + sep_w_bytes
    cost = pl.CostEstimate(flops=int(flops), transcendentals=0,
                           bytes_accessed=int(bytes_accessed))

    x3 = x.reshape(nc, h_in, w_in)
    wh = wh32.astype(w_dtype)               # (H_out, H_in)
    wwt = ww32.T.astype(w_dtype)            # pre-transposed: (W_in, W_out)

    out3 = pl.pallas_call(
        _up_separable_kernel,
        out_shape=jax.ShapeDtypeStruct((nc, h_out, w_out), x.dtype),
        grid_spec=pltpu.PrefetchScalarGridSpec(
            num_scalar_prefetch=0,
            grid=grid,
            in_specs=[
                pl.BlockSpec((cb, h_in, w_in), lambda i: (i, 0, 0)),
                pl.BlockSpec((h_out, h_in), lambda i: (0, 0)),
                pl.BlockSpec((w_in, w_out), lambda i: (0, 0)),
            ],
            out_specs=pl.BlockSpec((cb, h_out, w_out), lambda i: (i, 0, 0)),
        ),
        compiler_params=pltpu.CompilerParams(
            dimension_semantics=("parallel",),
            vmem_limit_bytes=int(vmem_limit)),
        cost_estimate=cost,
    )(x3, wh, wwt)
    return out3.reshape(n, c, h_out, w_out)


# ---------------------------------------------------------------------------
# Pure-JAX reference (matches torch bilinear align_corners=True).
# ---------------------------------------------------------------------------
def _reference_bilinear_align_corners(x, scale_factor):
    _, _, h_in, w_in = x.shape
    h_out = int(math.floor(h_in * scale_factor))
    w_out = int(math.floor(w_in * scale_factor))
    wh = _interp_matrix(h_out, h_in)
    ww = _interp_matrix(w_out, w_in)
    return jnp.einsum("oh,nchw,pw->ncop", wh, x.astype(jnp.float32), ww).astype(x.dtype)


if __name__ == "__main__":
    key = jax.random.PRNGKey(0)
    x = jax.random.normal(key, (2, 4, 16, 16), dtype=jnp.float32)  # NCHW
    scale_factor = 2

    ref = _reference_bilinear_align_corners(x, scale_factor)

    # Auto-selected path (roofline-gated per chip generation).
    out = jax.block_until_ready(up_bilinear(x, scale_factor))
    assert out.shape == (2, 4, 32, 32), out.shape
    assert jnp.allclose(out, ref, atol=1e-5, rtol=1e-5), "auto path mismatch"

    # Fused (lane-dense kron) path, exercised explicitly for coverage.
    out_fused = jax.block_until_ready(
        up_bilinear(x, scale_factor, _force_fused=True))
    assert out_fused.shape == (2, 4, 32, 32), out_fused.shape
    assert jnp.allclose(out_fused, ref, atol=1e-5, rtol=1e-5), "fused path mismatch"

    # General separable (channel-folded, large-M W-pass) path.
    out_sep = jax.block_until_ready(
        up_bilinear(x, scale_factor, _force_separable=True))
    assert out_sep.shape == (2, 4, 32, 32), out_sep.shape
    assert jnp.allclose(out_sep, ref, atol=1e-5, rtol=1e-5), "separable path mismatch"

    print("KERNEL_OK")
</pallas_src>

<mosaic_0001>
module attributes {stable_mosaic.version = 11 : i64} {
  func.func @_up_separable_kernel(%arg0: i32, %arg1: memref<8x16x16xf32, #tpu.memory_space<vmem>>, %arg2: memref<32x16xf32, #tpu.memory_space<vmem>>, %arg3: memref<16x32xf32, #tpu.memory_space<vmem>>, %arg4: memref<8x32x32xf32, #tpu.memory_space<vmem>>) attributes {dimension_semantics = [#tpu.dimension_semantics<parallel>], iteration_bounds = array<i64: 1>, scalar_prefetch = 0 : i64, scratch_operands = 0 : i64, tpu.core_type = #tpu.core_type<tc>, window_params = [{transform_indices = @transform_0, window_bounds = array<i64: 8, 16, 16>}, {pipeline_mode = #tpu.pipeline_mode<synchronous>, transform_indices = @transform_1, window_bounds = array<i64: 32, 16>}, {pipeline_mode = #tpu.pipeline_mode<synchronous>, transform_indices = @transform_2, window_bounds = array<i64: 16, 32>}, {transform_indices = @transform_3, window_bounds = array<i64: 8, 32, 32>}]} {
    %c0 = arith.constant 0 : index
    %c0_0 = arith.constant 0 : index
    %0 = vector.load %arg2[%c0, %c0_0] : memref<32x16xf32, #tpu.memory_space<vmem>>, vector<32x16xf32>
    %c0_1 = arith.constant 0 : index
    %c0_2 = arith.constant 0 : index
    %1 = vector.load %arg3[%c0_1, %c0_2] : memref<16x32xf32, #tpu.memory_space<vmem>>, vector<16x32xf32>
    %c0_3 = arith.constant 0 : index
    %c0_4 = arith.constant 0 : index
    %c0_5 = arith.constant 0 : index
    %2 = vector.load %arg1[%c0_3, %c0_4, %c0_5] : memref<8x16x16xf32, #tpu.memory_space<vmem>>, vector<8x16x16xf32>
    %3 = vector.shape_cast %2 : vector<8x16x16xf32> to vector<128x16xf32>
    %cst = arith.constant dense<0.000000e+00> : vector<128x32xf32>
    %4 = tpu.matmul %3, %1, %cst {dimension_numbers = #tpu.dot_dimension_numbers<[1], [0], [0], [1], [0, 0, 1, 1], [], []>} : vector<128x16xf32>, vector<16x32xf32>, vector<128x32xf32> -> vector<128x32xf32>
    %5 = vector.shape_cast %4 : vector<128x32xf32> to vector<8x16x32xf32>
    %6 = vector.extract_strided_slice %5 {offsets = [0, 0, 0], sizes = [1, 16, 32], strides = [1, 1, 1]} : vector<8x16x32xf32> to vector<1x16x32xf32>
    %7 = vector.shape_cast %6 : vector<1x16x32xf32> to vector<16x32xf32>
    %cst_6 = arith.constant dense<0.000000e+00> : vector<32x32xf32>
    %8 = tpu.matmul %0, %7, %cst_6 {dimension_numbers = #tpu.dot_dimension_numbers<[1], [0], [0], [1], [0, 0, 1, 1], [], []>} : vector<32x16xf32>, vector<16x32xf32>, vector<32x32xf32> -> vector<32x32xf32>
    %c0_7 = arith.constant 0 : index
    %c0_8 = arith.constant 0 : index
    %c0_9 = arith.constant 0 : index
    %9 = vector.load %arg4[%c0_7, %c0_8, %c0_9] : memref<8x32x32xf32, #tpu.memory_space<vmem>>, vector<1x32x32xf32>
    %10 = vector.shape_cast %9 : vector<1x32x32xf32> to vector<32x32xf32>
    %11 = vector.shape_cast %8 : vector<32x32xf32> to vector<1x32x32xf32>
    tpu.vector_store %arg4[%c0_7, %c0_8, %c0_9], %11 {strides = array<i32>} : memref<8x32x32xf32, #tpu.memory_space<vmem>>, vector<1x32x32xf32>,
    %12 = vector.extract_strided_slice %5 {offsets = [1, 0, 0], sizes = [1, 16, 32], strides = [1, 1, 1]} : vector<8x16x32xf32> to vector<1x16x32xf32>
    %13 = vector.shape_cast %12 : vector<1x16x32xf32> to vector<16x32xf32>
    %cst_10 = arith.constant dense<0.000000e+00> : vector<32x32xf32>
    %14 = tpu.matmul %0, %13, %cst_10 {dimension_numbers = #tpu.dot_dimension_numbers<[1], [0], [0], [1], [0, 0, 1, 1], [], []>} : vector<32x16xf32>, vector<16x32xf32>, vector<32x32xf32> -> vector<32x32xf32>
    %c1 = arith.constant 1 : index
    %c0_11 = arith.constant 0 : index
    %c0_12 = arith.constant 0 : index
    %15 = vector.load %arg4[%c1, %c0_11, %c0_12] : memref<8x32x32xf32, #tpu.memory_space<vmem>>, vector<1x32x32xf32>
    %16 = vector.shape_cast %15 : vector<1x32x32xf32> to vector<32x32xf32>
    %17 = vector.shape_cast %14 : vector<32x32xf32> to vector<1x32x32xf32>
    tpu.vector_store %arg4[%c1, %c0_11, %c0_12], %17 {strides = array<i32>} : memref<8x32x32xf32, #tpu.memory_space<vmem>>, vector<1x32x32xf32>,
    %18 = vector.extract_strided_slice %5 {offsets = [2, 0, 0], sizes = [1, 16, 32], strides = [1, 1, 1]} : vector<8x16x32xf32> to vector<1x16x32xf32>
    %19 = vector.shape_cast %18 : vector<1x16x32xf32> to vector<16x32xf32>
    %cst_13 = arith.constant dense<0.000000e+00> : vector<32x32xf32>
    %20 = tpu.matmul %0, %19, %cst_13 {dimension_numbers = #tpu.dot_dimension_numbers<[1], [0], [0], [1], [0, 0, 1, 1], [], []>} : vector<32x16xf32>, vector<16x32xf32>, vector<32x32xf32> -> vector<32x32xf32>
    %c2 = arith.constant 2 : index
    %c0_14 = arith.constant 0 : index
    %c0_15 = arith.constant 0 : index
    %21 = vector.load %arg4[%c2, %c0_14, %c0_15] : memref<8x32x32xf32, #tpu.memory_space<vmem>>, vector<1x32x32xf32>
    %22 = vector.shape_cast %21 : vector<1x32x32xf32> to vector<32x32xf32>
    %23 = vector.shape_cast %20 : vector<32x32xf32> to vector<1x32x32xf32>
    tpu.vector_store %arg4[%c2, %c0_14, %c0_15], %23 {strides = array<i32>} : memref<8x32x32xf32, #tpu.memory_space<vmem>>, vector<1x32x32xf32>,
    %24 = vector.extract_strided_slice %5 {offsets = [3, 0, 0], sizes = [1, 16, 32], strides = [1, 1, 1]} : vector<8x16x32xf32> to vector<1x16x32xf32>
    %25 = vector.shape_cast %24 : vector<1x16x32xf32> to vector<16x32xf32>
    %cst_16 = arith.constant dense<0.000000e+00> : vector<32x32xf32>
    %26 = tpu.matmul %0, %25, %cst_16 {dimension_numbers = #tpu.dot_dimension_numbers<[1], [0], [0], [1], [0, 0, 1, 1], [], []>} : vector<32x16xf32>, vector<16x32xf32>, vector<32x32xf32> -> vector<32x32xf32>
    %c3 = arith.constant 3 : index
    %c0_17 = arith.constant 0 : index
    %c0_18 = arith.constant 0 : index
    %27 = vector.load %arg4[%c3, %c0_17, %c0_18] : memref<8x32x32xf32, #tpu.memory_space<vmem>>, vector<1x32x32xf32>
    %28 = vector.shape_cast %27 : vector<1x32x32xf32> to vector<32x32xf32>
    %29 = vector.shape_cast %26 : vector<32x32xf32> to vector<1x32x32xf32>
    tpu.vector_store %arg4[%c3, %c0_17, %c0_18], %29 {strides = array<i32>} : memref<8x32x32xf32, #tpu.memory_space<vmem>>, vector<1x32x32xf32>,
    %30 = vector.extract_strided_slice %5 {offsets = [4, 0, 0], sizes = [1, 16, 32], strides = [1, 1, 1]} : vector<8x16x32xf32> to vector<1x16x32xf32>
    %31 = vector.shape_cast %30 : vector<1x16x32xf32> to vector<16x32xf32>
    %cst_19 = arith.constant dense<0.000000e+00> : vector<32x32xf32>
    %32 = tpu.matmul %0, %31, %cst_19 {dimension_numbers = #tpu.dot_dimension_numbers<[1], [0], [0], [1], [0, 0, 1, 1], [], []>} : vector<32x16xf32>, vector<16x32xf32>, vector<32x32xf32> -> vector<32x32xf32>
    %c4 = arith.constant 4 : index
    %c0_20 = arith.constant 0 : index
    %c0_21 = arith.constant 0 : index
    %33 = vector.load %arg4[%c4, %c0_20, %c0_21] : memref<8x32x32xf32, #tpu.memory_space<vmem>>, vector<1x32x32xf32>
    %34 = vector.shape_cast %33 : vector<1x32x32xf32> to vector<32x32xf32>
    %35 = vector.shape_cast %32 : vector<32x32xf32> to vector<1x32x32xf32>
    tpu.vector_store %arg4[%c4, %c0_20, %c0_21], %35 {strides = array<i32>} : memref<8x32x32xf32, #tpu.memory_space<vmem>>, vector<1x32x32xf32>,
    %36 = vector.extract_strided_slice %5 {offsets = [5, 0, 0], sizes = [1, 16, 32], strides = [1, 1, 1]} : vector<8x16x32xf32> to vector<1x16x32xf32>
    %37 = vector.shape_cast %36 : vector<1x16x32xf32> to vector<16x32xf32>
    %cst_22 = arith.constant dense<0.000000e+00> : vector<32x32xf32>
    %38 = tpu.matmul %0, %37, %cst_22 {dimension_numbers = #tpu.dot_dimension_numbers<[1], [0], [0], [1], [0, 0, 1, 1], [], []>} : vector<32x16xf32>, vector<16x32xf32>, vector<32x32xf32> -> vector<32x32xf32>
    %c5 = arith.constant 5 : index
    %c0_23 = arith.constant 0 : index
    %c0_24 = arith.constant 0 : index
    %39 = vector.load %arg4[%c5, %c0_23, %c0_24] : memref<8x32x32xf32, #tpu.memory_space<vmem>>, vector<1x32x32xf32>
    %40 = vector.shape_cast %39 : vector<1x32x32xf32> to vector<32x32xf32>
    %41 = vector.shape_cast %38 : vector<32x32xf32> to vector<1x32x32xf32>
    tpu.vector_store %arg4[%c5, %c0_23, %c0_24], %41 {strides = array<i32>} : memref<8x32x32xf32, #tpu.memory_space<vmem>>, vector<1x32x32xf32>,
    %42 = vector.extract_strided_slice %5 {offsets = [6, 0, 0], sizes = [1, 16, 32], strides = [1, 1, 1]} : vector<8x16x32xf32> to vector<1x16x32xf32>
    %43 = vector.shape_cast %42 : vector<1x16x32xf32> to vector<16x32xf32>
    %cst_25 = arith.constant dense<0.000000e+00> : vector<32x32xf32>
    %44 = tpu.matmul %0, %43, %cst_25 {dimension_numbers = #tpu.dot_dimension_numbers<[1], [0], [0], [1], [0, 0, 1, 1], [], []>} : vector<32x16xf32>, vector<16x32xf32>, vector<32x32xf32> -> vector<32x32xf32>
    %c6 = arith.constant 6 : index
    %c0_26 = arith.constant 0 : index
    %c0_27 = arith.constant 0 : index
    %45 = vector.load %arg4[%c6, %c0_26, %c0_27] : memref<8x32x32xf32, #tpu.memory_space<vmem>>, vector<1x32x32xf32>
    %46 = vector.shape_cast %45 : vector<1x32x32xf32> to vector<32x32xf32>
    %47 = vector.shape_cast %44 : vector<32x32xf32> to vector<1x32x32xf32>
    tpu.vector_store %arg4[%c6, %c0_26, %c0_27], %47 {strides = array<i32>} : memref<8x32x32xf32, #tpu.memory_space<vmem>>, vector<1x32x32xf32>,
    %48 = vector.extract_strided_slice %5 {offsets = [7, 0, 0], sizes = [1, 16, 32], strides = [1, 1, 1]} : vector<8x16x32xf32> to vector<1x16x32xf32>
    %49 = vector.shape_cast %48 : vector<1x16x32xf32> to vector<16x32xf32>
    %cst_28 = arith.constant dense<0.000000e+00> : vector<32x32xf32>
    %50 = tpu.matmul %0, %49, %cst_28 {dimension_numbers = #tpu.dot_dimension_numbers<[1], [0], [0], [1], [0, 0, 1, 1], [], []>} : vector<32x16xf32>, vector<16x32xf32>, vector<32x32xf32> -> vector<32x32xf32>
    %c7 = arith.constant 7 : index
    %c0_29 = arith.constant 0 : index
    %c0_30 = arith.constant 0 : index
    %51 = vector.load %arg4[%c7, %c0_29, %c0_30] : memref<8x32x32xf32, #tpu.memory_space<vmem>>, vector<1x32x32xf32>
    %52 = vector.shape_cast %51 : vector<1x32x32xf32> to vector<32x32xf32>
    %53 = vector.shape_cast %50 : vector<32x32xf32> to vector<1x32x32xf32>
    tpu.vector_store %arg4[%c7, %c0_29, %c0_30], %53 {strides = array<i32>} : memref<8x32x32xf32, #tpu.memory_space<vmem>>, vector<1x32x32xf32>,
    return
  }
  func.func @transform_0(%arg0: i32) -> (i32, i32, i32) {
    %c0_i32 = arith.constant 0 : i32
    %c0_i32_0 = arith.constant 0 : i32
    %c0_i32_1 = arith.constant 0 : i32
    return %arg0, %c0_i32, %c0_i32_0 : i32, i32, i32
  }
  func.func @transform_1(%arg0: i32) -> (i32, i32) {
    %c0_i32 = arith.constant 0 : i32
    %c0_i32_0 = arith.constant 0 : i32
    %c0_i32_1 = arith.constant 0 : i32
    return %c0_i32, %c0_i32_0 : i32, i32
  }
  func.func @transform_2(%arg0: i32) -> (i32, i32) {
    %c0_i32 = arith.constant 0 : i32
    %c0_i32_0 = arith.constant 0 : i32
    %c0_i32_1 = arith.constant 0 : i32
    return %c0_i32, %c0_i32_0 : i32, i32
  }
  func.func @transform_3(%arg0: i32) -> (i32, i32, i32) {
    %c0_i32 = arith.constant 0 : i32
    %c0_i32_0 = arith.constant 0 : i32
    %c0_i32_1 = arith.constant 0 : i32
    return %arg0, %c0_i32, %c0_i32_0 : i32, i32, i32
  }
}

</mosaic_0001>

<llo_original>
// kernel: tpu_custom_call.1
$region0: #{tpu_custom_call.1}
  #allocation0 [shape = 'u32[]', space=smem, size = 0x4, offset = 0x4, fixed_abs, tag = 'smem constant byte address 0x4 - core index']
  #allocation1 [shape = 'u32[144,128]{1,0:T(1,128)}', space=vmem, size = 0x12000, scoped, tag = 'internal scratch']
  %s0 = inlined_call_operand.hbm [shape: f32[8,16,16], index: 0, kind: input, shape index: {}]
  %s1 = inlined_call_operand.vmem [shape: f32[32,16], index: 1, kind: input, shape index: {}]
  %s2 = inlined_call_operand.vmem [shape: f32[16,32], index: 2, kind: input, shape index: {}]
  %s3 = inlined_call_operand.hbm [shape: f32[8,32,32], index: 3, kind: output, shape index: {}]
  %s4 = sld [smem:[#allocation0]]
  $region26: #{tpu_custom_call.1} parent=0
    _
  %s6 = ssub.s32 1, %s4
  %s7 = scalar_select 0, %s6, %s4
  $region1: #{tpu_custom_call.1} parent=0
    #allocation2 [shape = 'u8[65536]{0}', space=vmem, size = 0x10000, scoped, tag = 'input window, operand 0, single buffered']
    #allocation3 [shape = 's32[1]{0}', space=sflag, size = 0x4, scoped, tag = 'scoped memory for tpu_custom_call.1']
    #allocation4 [shape = 's32[1]{0}', space=sflag, size = 0x4, scoped, tag = 'scoped memory for tpu_custom_call.1']
    #allocation5 [shape = 'u8[131072]{0}', space=vmem, size = 0x20000, scoped, tag = 'output window, operand 0, single buffered']
    %8 = vsyncpa [#allocation3], 0
    %9 = vsyncpa [#allocation4], 0
    // Predicated region
    $region2: #{tpu_custom_call.1} parent=1 // pred_check
      _
    $region3: #{tpu_custom_call.1} parent=1 // pred_check_branch
      %11 = sbr.rel (0) target = $region5
    $region4: #{tpu_custom_call.1} parent=1 // pred_region
      %s13 = ssub.s32 2048, 2048
      %14 = vsyncadd [#allocation3], %s13
      %s15 = sshll.u32 [#allocation2], 4
      %s16 = int_to_ptr.vmem [resolvable:$true] %s15
      %21 = dma.hbm_to_vmem [thread:$0]  %s0, 2048, %s16, [#allocation3], 128, 128, 8
    $region5: #{tpu_custom_call.1} parent=1 // pred_fallthru
      _
    // Predicated region
    $region6: #{tpu_custom_call.1} parent=1 // pred_check
      _
    $region7: #{tpu_custom_call.1} parent=1 // pred_check_branch
      %23 = sbr.rel (0) target = $region9
    $region8: #{tpu_custom_call.1} parent=1 // pred_region
      _
    $region9: #{tpu_custom_call.1} parent=1 // pred_fallthru
      _
    // Predicated region
    $region10: #{tpu_custom_call.1} parent=1 // pred_check
      _
    $region11: #{tpu_custom_call.1} parent=1 // pred_check_branch
      %25 = sbr.rel (0) target = $region13
    $region12: #{tpu_custom_call.1} parent=1 // pred_region
      _
    $region13: #{tpu_custom_call.1} parent=1 // pred_fallthru
      _
    // Predicated region
    $region14: #{tpu_custom_call.1} parent=1 // pred_check
      _
    $region15: #{tpu_custom_call.1} parent=1 // pred_check_branch
      %27 = sbr.rel (0) target = $region17
    $region16: #{tpu_custom_call.1} parent=1 // pred_region
      %28 = dma.done [#allocation3], 2048
    $region17: #{tpu_custom_call.1} parent=1 // pred_fallthru
      _
    %v29 = vld [vmem:[%s1] sm:$0xff]
    %v30 = vld [vmem:[%s1 + $0x8] sm:$0xff]
    %v31 = vld [vmem:[%s1 + $0x10] sm:$0xff]
    %v32 = vld [vmem:[%s1 + $0x18] sm:$0xff]
    %v33 = vld [vmem:[%s2] sm:$0xff]
    %v34 = vld [vmem:[%s2 + $0x8] sm:$0xff]
    %v35 = vld [vmem:[#allocation2] sm:$0xff]
    %v36 = vld [vmem:[#allocation2 + $0x8] sm:$0xff]
    %v37 = vld [vmem:[#allocation2 + $0x10] sm:$0xff]
    %v38 = vld [vmem:[#allocation2 + $0x18] sm:$0xff]
    %v39 = vld [vmem:[#allocation2 + $0x20] sm:$0xff]
    %v40 = vld [vmem:[#allocation2 + $0x28] sm:$0xff]
    %v41 = vld [vmem:[#allocation2 + $0x30] sm:$0xff]
    %v42 = vld [vmem:[#allocation2 + $0x38] sm:$0xff]
    %v43 = vld [vmem:[#allocation2 + $0x40] sm:$0xff]
    %v44 = vld [vmem:[#allocation2 + $0x48] sm:$0xff]
    %v45 = vld [vmem:[#allocation2 + $0x50] sm:$0xff]
    %v46 = vld [vmem:[#allocation2 + $0x58] sm:$0xff]
    %v47 = vld [vmem:[#allocation2 + $0x60] sm:$0xff]
    %v48 = vld [vmem:[#allocation2 + $0x68] sm:$0xff]
    %v49 = vld [vmem:[#allocation2 + $0x70] sm:$0xff]
    %v50 = vld [vmem:[#allocation2 + $0x78] sm:$0xff]
    %vm51 = vcmask 130048
    %v53 = vsel %vm51, %v35, 0
    %v56 = vsel %vm51, %v36, 0
    %v59 = vsel %vm51, %v37, 0
    %v62 = vsel %vm51, %v38, 0
    %v65 = vsel %vm51, %v39, 0
    %v68 = vsel %vm51, %v40, 0
    %v71 = vsel %vm51, %v41, 0
    %v74 = vsel %vm51, %v42, 0
    %v77 = vsel %vm51, %v43, 0
    %v80 = vsel %vm51, %v44, 0
    %v83 = vsel %vm51, %v45, 0
    %v86 = vsel %vm51, %v46, 0
    %v89 = vsel %vm51, %v47, 0
    %v92 = vsel %vm51, %v48, 0
    %v95 = vsel %vm51, %v49, 0
    %v98 = vsel %vm51, %v50, 0
    %100 = vmatprep.subr.mxu0 0.0
    %101 = vmatpush1.msra.mxu0 %v33
    %102 = vmatprep.subr.mxu0 0.0
    %103 = vmatpush1.msra.mxu0 %v34
    %104 = vmatprep.subr.mxu0 0.0
    %105 = vmatpush1.msra.mxu0 0.0
    %106 = vmatprep.subr.mxu0 0.0
    %107 = vmatpush1.msra.mxu0 0.0
    %108 = vmatprep.subr.mxu0 0.0
    %109 = vmatpush1.msra.mxu0 0.0
    %110 = vmatprep.subr.mxu0 0.0
    %111 = vmatpush1.msra.mxu0 0.0
    %112 = vmatprep.subr.mxu0 0.0
    %113 = vmatpush1.msra.mxu0 0.0
    %114 = vmatprep.subr.mxu0 0.0
    %115 = vmatpush1.msra.mxu0 0.0
    %116 = vmatprep.subr.mxu0 0.0
    %117 = vmatpush1.msra.mxu0 0.0
    %118 = vmatprep.subr.mxu0 0.0
    %119 = vmatpush1.msra.mxu0 0.0
    %120 = vmatprep.subr.mxu0 0.0
    %121 = vmatpush1.msra.mxu0 0.0
    %122 = vmatprep.subr.mxu0 0.0
    %123 = vmatpush1.msra.mxu0 0.0
    %124 = vmatprep.subr.mxu0 0.0
    %125 = vmatpush1.msra.mxu0 0.0
    %126 = vmatprep.subr.mxu0 0.0
    %127 = vmatpush1.msra.mxu0 0.0
    %128 = vmatprep.subr.mxu0 0.0
    %129 = vmatpush1.msra.mxu0 0.0
    %130 = vmatprep.subr.mxu0 0.0
    %131 = vmatpush1.msra.mxu0 0.0
    %132 = vmatprep.subr.mxu0 0.0
    %133 = vmatpush1.msra.mxu0 0.0
    %134 = vmatprep.subr.mxu0 0.0
    %135 = vmatpush1.msra.mxu0 0.0
    %136 = vmatprep.subr.mxu0 0.0
    %137 = vmatpush1.msra.mxu0 0.0
    %138 = vmatprep.subr.mxu0 0.0
    %139 = vmatpush1.msra.mxu0 0.0
    %140 = vmatprep.subr.mxu0 0.0
    %141 = vmatpush1.msra.mxu0 0.0
    %142 = vmatprep.subr.mxu0 0.0
    %143 = vmatpush1.msra.mxu0 0.0
    %144 = vmatprep.subr.mxu0 0.0
    %145 = vmatpush1.msra.mxu0 0.0
    %146 = vmatprep.subr.mxu0 0.0
    %147 = vmatpush1.msra.mxu0 0.0
    %148 = vmatprep.subr.mxu0 0.0
    %149 = vmatpush1.msra.mxu0 0.0
    %150 = vmatprep.subr.mxu0 0.0
    %151 = vmatpush1.msra.mxu0 0.0
    %152 = vmatprep.subr.mxu0 0.0
    %153 = vmatpush1.msra.mxu0 0.0
    %154 = vmatprep.subr.mxu0 0.0
    %155 = vmatpush1.msra.mxu0 0.0
    %156 = vmatprep.subr.mxu0 0.0
    %157 = vmatpush1.msra.mxu0 0.0
    %158 = vmatprep.subr.mxu0 0.0
    %159 = vmatpush1.msra.mxu0 0.0
    %160 = vmatprep.subr.mxu0 0.0
    %161 = vmatpush1.msra.mxu0 0.0
    %162 = vmatprep.subr.mxu0 0.0
    %163 = vmatpush1.msra.mxu0 0.0
    %164 = vmatprep.mubr.f32.mxu0 0.0
    %165 = vmatmul.mubr.f32.gmra.mrb[0].mxu0 %v53
    %v166 = vpop.f32.mrb[0].mxu0
    %v167 = vadd.f32 0.0, %v166
    %v168 = vpop.f32.mrb[0].mxu0
    %169 = vmatprep.mubr.f32.mxu0 0.0
    %170 = vmatmul.mubr.f32.gmra.mrb[0].mxu0 %v56
    %v171 = vpop.f32.mrb[0].mxu0
    %v172 = vadd.f32 0.0, %v171
    %v173 = vpop.f32.mrb[0].mxu0
    %174 = vmatprep.mubr.f32.mxu0 0.0
    %175 = vmatmul.mubr.f32.gmra.mrb[0].mxu0 %v59
    %v176 = vpop.f32.mrb[0].mxu0
    %v177 = vadd.f32 0.0, %v176
    %v178 = vpop.f32.mrb[0].mxu0
    %179 = vmatprep.mubr.f32.mxu0 0.0
    %180 = vmatmul.mubr.f32.gmra.mrb[0].mxu0 %v62
    %v181 = vpop.f32.mrb[0].mxu0
    %v182 = vadd.f32 0.0, %v181
    %v183 = vpop.f32.mrb[0].mxu0
    %184 = vmatprep.mubr.f32.mxu0 0.0
    %185 = vmatmul.mubr.f32.gmra.mrb[0].mxu0 %v65
    %v186 = vpop.f32.mrb[0].mxu0
    %v187 = vadd.f32 0.0, %v186
    %v188 = vpop.f32.mrb[0].mxu0
    %189 = vmatprep.mubr.f32.mxu0 0.0
    %190 = vmatmul.mubr.f32.gmra.mrb[0].mxu0 %v68
    %v191 = vpop.f32.mrb[0].mxu0
    %v192 = vadd.f32 0.0, %v191
    %v193 = vpop.f32.mrb[0].mxu0
    %194 = vmatprep.mubr.f32.mxu0 0.0
    %195 = vmatmul.mubr.f32.gmra.mrb[0].mxu0 %v71
    %v196 = vpop.f32.mrb[0].mxu0
    %v197 = vadd.f32 0.0, %v196
    %v198 = vpop.f32.mrb[0].mxu0
    %199 = vmatprep.mubr.f32.mxu0 0.0
    %200 = vmatmul.mubr.f32.gmra.mrb[0].mxu0 %v74
    %v201 = vpop.f32.mrb[0].mxu0
    %v202 = vadd.f32 0.0, %v201
    %v203 = vpop.f32.mrb[0].mxu0
    %204 = vmatprep.mubr.f32.mxu0 0.0
    %205 = vmatmul.mubr.f32.gmra.mrb[0].mxu0 %v77
    %v206 = vpop.f32.mrb[0].mxu0
    %v207 = vadd.f32 0.0, %v206
    %v208 = vpop.f32.mrb[0].mxu0
    %209 = vmatprep.mubr.f32.mxu0 0.0
    %210 = vmatmul.mubr.f32.gmra.mrb[0].mxu0 %v80
    %v211 = vpop.f32.mrb[0].mxu0
    %v212 = vadd.f32 0.0, %v211
    %v213 = vpop.f32.mrb[0].mxu0
    %214 = vmatprep.mubr.f32.mxu0 0.0
    %215 = vmatmul.mubr.f32.gmra.mrb[0].mxu0 %v83
    %v216 = vpop.f32.mrb[0].mxu0
    %v217 = vadd.f32 0.0, %v216
    %v218 = vpop.f32.mrb[0].mxu0
    %219 = vmatprep.mubr.f32.mxu0 0.0
    %220 = vmatmul.mubr.f32.gmra.mrb[0].mxu0 %v86
    %v221 = vpop.f32.mrb[0].mxu0
    %v222 = vadd.f32 0.0, %v221
    %v223 = vpop.f32.mrb[0].mxu0
    %224 = vmatprep.mubr.f32.mxu0 0.0
    %225 = vmatmul.mubr.f32.gmra.mrb[0].mxu0 %v89
    %v226 = vpop.f32.mrb[0].mxu0
    %v227 = vadd.f32 0.0, %v226
    %v228 = vpop.f32.mrb[0].mxu0
    %229 = vmatprep.mubr.f32.mxu0 0.0
    %230 = vmatmul.mubr.f32.gmra.mrb[0].mxu0 %v92
    %v231 = vpop.f32.mrb[0].mxu0
    %v232 = vadd.f32 0.0, %v231
    %v233 = vpop.f32.mrb[0].mxu0
    %234 = vmatprep.mubr.f32.mxu0 0.0
    %235 = vmatmul.mubr.f32.gmra.mrb[0].mxu0 %v95
    %v236 = vpop.f32.mrb[0].mxu0
    %v237 = vadd.f32 0.0, %v236
    %v238 = vpop.f32.mrb[0].mxu0
    %239 = vmatprep.mubr.f32.mxu0 0.0
    %240 = vmatmul.mubr.f32.gmra.mrb[0].mxu0 %v98
    %v241 = vpop.f32.mrb[0].mxu0
    %v242 = vadd.f32 0.0, %v241
    %v243 = vpop.f32.mrb[0].mxu0
    %244 = vdwg.mxu0
    %v246 = vsel %vm51, %v29, 0
    %v249 = vsel %vm51, %v30, 0
    %v252 = vsel %vm51, %v31, 0
    %v255 = vsel %vm51, %v32, 0
    %257 = vmatprep.subr.mxu0 0.0
    %258 = vmatpush1.msra.mxu0 %v167
    %259 = vmatprep.subr.mxu0 0.0
    %260 = vmatpush1.msra.mxu0 %v172
    %261 = vmatprep.subr.mxu0 0.0
    %262 = vmatpush1.msra.mxu0 0.0
    %263 = vmatprep.subr.mxu0 0.0
    %264 = vmatpush1.msra.mxu0 0.0
    %265 = vmatprep.subr.mxu0 0.0
    %266 = vmatpush1.msra.mxu0 0.0
    %267 = vmatprep.subr.mxu0 0.0
    %268 = vmatpush1.msra.mxu0 0.0
    %269 = vmatprep.subr.mxu0 0.0
    %270 = vmatpush1.msra.mxu0 0.0
    %271 = vmatprep.subr.mxu0 0.0
    %272 = vmatpush1.msra.mxu0 0.0
    %273 = vmatprep.subr.mxu0 0.0
    %274 = vmatpush1.msra.mxu0 0.0
    %275 = vmatprep.subr.mxu0 0.0
    %276 = vmatpush1.msra.mxu0 0.0
    %277 = vmatprep.subr.mxu0 0.0
    %278 = vmatpush1.msra.mxu0 0.0
    %279 = vmatprep.subr.mxu0 0.0
    %280 = vmatpush1.msra.mxu0 0.0
    %281 = vmatprep.subr.mxu0 0.0
    %282 = vmatpush1.msra.mxu0 0.0
    %283 = vmatprep.subr.mxu0 0.0
    %284 = vmatpush1.msra.mxu0 0.0
    %285 = vmatprep.subr.mxu0 0.0
    %286 = vmatpush1.msra.mxu0 0.0
    %287 = vmatprep.subr.mxu0 0.0
    %288 = vmatpush1.msra.mxu0 0.0
    %289 = vmatprep.subr.mxu0 0.0
    %290 = vmatpush1.msra.mxu0 0.0
    %291 = vmatprep.subr.mxu0 0.0
    %292 = vmatpush1.msra.mxu0 0.0
    %293 = vmatprep.subr.mxu0 0.0
    %294 = vmatpush1.msra.mxu0 0.0
    %295 = vmatprep.subr.mxu0 0.0
    %296 = vmatpush1.msra.mxu0 0.0
    %297 = vmatprep.subr.mxu0 0.0
    %298 = vmatpush1.msra.mxu0 0.0
    %299 = vmatprep.subr.mxu0 0.0
    %300 = vmatpush1.msra.mxu0 0.0
    %301 = vmatprep.subr.mxu0 0.0
    %302 = vmatpush1.msra.mxu0 0.0
    %303 = vmatprep.subr.mxu0 0.0
    %304 = vmatpush1.msra.mxu0 0.0
    %305 = vmatprep.subr.mxu0 0.0
    %306 = vmatpush1.msra.mxu0 0.0
    %307 = vmatprep.subr.mxu0 0.0
    %308 = vmatpush1.msra.mxu0 0.0
    %309 = vmatprep.subr.mxu0 0.0
    %310 = vmatpush1.msra.mxu0 0.0
    %311 = vmatprep.subr.mxu0 0.0
    %312 = vmatpush1.msra.mxu0 0.0
    %313 = vmatprep.subr.mxu0 0.0
    %314 = vmatpush1.msra.mxu0 0.0
    %315 = vmatprep.subr.mxu0 0.0
    %316 = vmatpush1.msra.mxu0 0.0
    %317 = vmatprep.subr.mxu0 0.0
    %318 = vmatpush1.msra.mxu0 0.0
    %319 = vmatprep.subr.mxu0 0.0
    %320 = vmatpush1.msra.mxu0 0.0
    %321 = vmatprep.mubr.f32.mxu0 0.0
    %322 = vmatmul.mubr.f32.gmra.mrb[0].mxu0 %v246
    %v323 = vpop.f32.mrb[0].mxu0
    %v324 = vadd.f32 0.0, %v323
    %v325 = vpop.f32.mrb[0].mxu0
    %326 = vmatprep.mubr.f32.mxu0 0.0
    %327 = vmatmul.mubr.f32.gmra.mrb[0].mxu0 %v249
    %v328 = vpop.f32.mrb[0].mxu0
    %v329 = vadd.f32 0.0, %v328
    %v330 = vpop.f32.mrb[0].mxu0
    %331 = vmatprep.mubr.f32.mxu0 0.0
    %332 = vmatmul.mubr.f32.gmra.mrb[0].mxu0 %v252
    %v333 = vpop.f32.mrb[0].mxu0
    %v334 = vadd.f32 0.0, %v333
    %v335 = vpop.f32.mrb[0].mxu0
    %336 = vmatprep.mubr.f32.mxu0 0.0
    %337 = vmatmul.mubr.f32.gmra.mrb[0].mxu0 %v255
    %v338 = vpop.f32.mrb[0].mxu0
    %v339 = vadd.f32 0.0, %v338
    %v340 = vpop.f32.mrb[0].mxu0
    %341 = vdwg.mxu0
    %vm342 = vcmask 261120
    %343 = vst.msk [vmem:[#allocation5] sm:$0xff] %vm342, %v324
    %344 = vst.msk [vmem:[#allocation5 + $0x8] sm:$0xff] %vm342, %v329
    %345 = vst.msk [vmem:[#allocation5 + $0x10] sm:$0xff] %vm342, %v334
    %346 = vst.msk [vmem:[#allocation5 + $0x18] sm:$0xff] %vm342, %v339
    %347 = vmatprep.subr.mxu0 0.0
    %348 = vmatpush1.msra.mxu0 %v177
    %349 = vmatprep.subr.mxu0 0.0
    %350 = vmatpush1.msra.mxu0 %v182
    %351 = vmatprep.subr.mxu0 0.0
    %352 = vmatpush1.msra.mxu0 0.0
    %353 = vmatprep.subr.mxu0 0.0
    %354 = vmatpush1.msra.mxu0 0.0
    %355 = vmatprep.subr.mxu0 0.0
    %356 = vmatpush1.msra.mxu0 0.0
    %357 = vmatprep.subr.mxu0 0.0
    %358 = vmatpush1.msra.mxu0 0.0
    %359 = vmatprep.subr.mxu0 0.0
    %360 = vmatpush1.msra.mxu0 0.0
    %361 = vmatprep.subr.mxu0 0.0
    %362 = vmatpush1.msra.mxu0 0.0
    %363 = vmatprep.subr.mxu0 0.0
    %364 = vmatpush1.msra.mxu0 0.0
    %365 = vmatprep.subr.mxu0 0.0
    %366 = vmatpush1.msra.mxu0 0.0
    %367 = vmatprep.subr.mxu0 0.0
    %368 = vmatpush1.msra.mxu0 0.0
    %369 = vmatprep.subr.mxu0 0.0
    %370 = vmatpush1.msra.mxu0 0.0
    %371 = vmatprep.subr.mxu0 0.0
    %372 = vmatpush1.msra.mxu0 0.0
    %373 = vmatprep.subr.mxu0 0.0
    %374 = vmatpush1.msra.mxu0 0.0
    %375 = vmatprep.subr.mxu0 0.0
    %376 = vmatpush1.msra.mxu0 0.0
    %377 = vmatprep.subr.mxu0 0.0
    %378 = vmatpush1.msra.mxu0 0.0
    %379 = vmatprep.subr.mxu0 0.0
    %380 = vmatpush1.msra.mxu0 0.0
    %381 = vmatprep.subr.mxu0 0.0
    %382 = vmatpush1.msra.mxu0 0.0
    %383 = vmatprep.subr.mxu0 0.0
    %384 = vmatpush1.msra.mxu0 0.0
    %385 = vmatprep.subr.mxu0 0.0
    %386 = vmatpush1.msra.mxu0 0.0
    %387 = vmatprep.subr.mxu0 0.0
    %388 = vmatpush1.msra.mxu0 0.0
    %389 = vmatprep.subr.mxu0 0.0
    %390 = vmatpush1.msra.mxu0 0.0
    %391 = vmatprep.subr.mxu0 0.0
    %392 = vmatpush1.msra.mxu0 0.0
    %393 = vmatprep.subr.mxu0 0.0
    %394 = vmatpush1.msra.mxu0 0.0
    %395 = vmatprep.subr.mxu0 0.0
    %396 = vmatpush1.msra.mxu0 0.0
    %397 = vmatprep.subr.mxu0 0.0
    %398 = vmatpush1.msra.mxu0 0.0
    %399 = vmatprep.subr.mxu0 0.0
    %400 = vmatpush1.msra.mxu0 0.0
    %401 = vmatprep.subr.mxu0 0.0
    %402 = vmatpush1.msra.mxu0 0.0
    %403 = vmatprep.subr.mxu0 0.0
    %404 = vmatpush1.msra.mxu0 0.0
    %405 = vmatprep.subr.mxu0 0.0
    %406 = vmatpush1.msra.mxu0 0.0
    %407 = vmatprep.subr.mxu0 0.0
    %408 = vmatpush1.msra.mxu0 0.0
    %409 = vmatprep.subr.mxu0 0.0
    %410 = vmatpush1.msra.mxu0 0.0
    %411 = vmatprep.mubr.f32.mxu0 0.0
    %412 = vmatmul.mubr.f32.gmra.mrb[0].mxu0 %v246
    %v413 = vpop.f32.mrb[0].mxu0
    %v414 = vadd.f32 0.0, %v413
    %v415 = vpop.f32.mrb[0].mxu0
    %416 = vmatprep.mubr.f32.mxu0 0.0
    %417 = vmatmul.mubr.f32.gmra.mrb[0].mxu0 %v249
    %v418 = vpop.f32.mrb[0].mxu0
    %v419 = vadd.f32 0.0, %v418
    %v420 = vpop.f32.mrb[0].mxu0
    %421 = vmatprep.mubr.f32.mxu0 0.0
    %422 = vmatmul.mubr.f32.gmra.mrb[0].mxu0 %v252
    %v423 = vpop.f32.mrb[0].mxu0
    %v424 = vadd.f32 0.0, %v423
    %v425 = vpop.f32.mrb[0].mxu0
    %426 = vmatprep.mubr.f32.mxu0 0.0
    %427 = vmatmul.mubr.f32.gmra.mrb[0].mxu0 %v255
    %v428 = vpop.f32.mrb[0].mxu0
    %v429 = vadd.f32 0.0, %v428
    %v430 = vpop.f32.mrb[0].mxu0
    %431 = vdwg.mxu0
    %s432 = scalar_lea.vmem [#allocation5], 32
    %433 = vst.msk [vmem:[%s432] sm:$0xff] %vm342, %v414
    %434 = vst.msk [vmem:[%s432 + $0x8] sm:$0xff] %vm342, %v419
    %435 = vst.msk [vmem:[%s432 + $0x10] sm:$0xff] %vm342, %v424
    %436 = vst.msk [vmem:[%s432 + $0x18] sm:$0xff] %vm342, %v429
    %437 = vmatprep.subr.mxu0 0.0
    %438 = vmatpush1.msra.mxu0 %v187
    %439 = vmatprep.subr.mxu0 0.0
    %440 = vmatpush1.msra.mxu0 %v192
    %441 = vmatprep.subr.mxu0 0.0
    %442 = vmatpush1.msra.mxu0 0.0
    %443 = vmatprep.subr.mxu0 0.0
    %444 = vmatpush1.msra.mxu0 0.0
    %445 = vmatprep.subr.mxu0 0.0
    %446 = vmatpush1.msra.mxu0 0.0
    %447 = vmatprep.subr.mxu0 0.0
    %448 = vmatpush1.msra.mxu0 0.0
    %449 = vmatprep.subr.mxu0 0.0
    %450 = vmatpush1.msra.mxu0 0.0
    %451 = vmatprep.subr.mxu0 0.0
    %452 = vmatpush1.msra.mxu0 0.0
    %453 = vmatprep.subr.mxu0 0.0
    %454 = vmatpush1.msra.mxu0 0.0
    %455 = vmatprep.subr.mxu0 0.0
    %456 = vmatpush1.msra.mxu0 0.0
    %457 = vmatprep.subr.mxu0 0.0
    %458 = vmatpush1.msra.mxu0 0.0
    %459 = vmatprep.subr.mxu0 0.0
    %460 = vmatpush1.msra.mxu0 0.0
    %461 = vmatprep.subr.mxu0 0.0
    %462 = vmatpush1.msra.mxu0 0.0
    %463 = vmatprep.subr.mxu0 0.0
    %464 = vmatpush1.msra.mxu0 0.0
    %465 = vmatprep.subr.mxu0 0.0
    %466 = vmatpush1.msra.mxu0 0.0
    %467 = vmatprep.subr.mxu0 0.0
    %468 = vmatpush1.msra.mxu0 0.0
    %469 = vmatprep.subr.mxu0 0.0
    %470 = vmatpush1.msra.mxu0 0.0
    %471 = vmatprep.subr.mxu0 0.0
    %472 = vmatpush1.msra.mxu0 0.0
    %473 = vmatprep.subr.mxu0 0.0
    %474 = vmatpush1.msra.mxu0 0.0
    %475 = vmatprep.subr.mxu0 0.0
    %476 = vmatpush1.msra.mxu0 0.0
    %477 = vmatprep.subr.mxu0 0.0
    %478 = vmatpush1.msra.mxu0 0.0
    %479 = vmatprep.subr.mxu0 0.0
    %480 = vmatpush1.msra.mxu0 0.0
    %481 = vmatprep.subr.mxu0 0.0
    %482 = vmatpush1.msra.mxu0 0.0
    %483 = vmatprep.subr.mxu0 0.0
    %484 = vmatpush1.msra.mxu0 0.0
    %485 = vmatprep.subr.mxu0 0.0
    %486 = vmatpush1.msra.mxu0 0.0
    %487 = vmatprep.subr.mxu0 0.0
    %488 = vmatpush1.msra.mxu0 0.0
    %489 = vmatprep.subr.mxu0 0.0
    %490 = vmatpush1.msra.mxu0 0.0
    %491 = vmatprep.subr.mxu0 0.0
    %492 = vmatpush1.msra.mxu0 0.0
    %493 = vmatprep.subr.mxu0 0.0
    %494 = vmatpush1.msra.mxu0 0.0
    %495 = vmatprep.subr.mxu0 0.0
    %496 = vmatpush1.msra.mxu0 0.0
    %497 = vmatprep.subr.mxu0 0.0
    %498 = vmatpush1.msra.mxu0 0.0
    %499 = vmatprep.subr.mxu0 0.0
    %500 = vmatpush1.msra.mxu0 0.0
    %501 = vmatprep.mubr.f32.mxu0 0.0
    %502 = vmatmul.mubr.f32.gmra.mrb[0].mxu0 %v246
    %v503 = vpop.f32.mrb[0].mxu0
    %v504 = vadd.f32 0.0, %v503
    %v505 = vpop.f32.mrb[0].mxu0
    %506 = vmatprep.mubr.f32.mxu0 0.0
    %507 = vmatmul.mubr.f32.gmra.mrb[0].mxu0 %v249
    %v508 = vpop.f32.mrb[0].mxu0
    %v509 = vadd.f32 0.0, %v508
    %v510 = vpop.f32.mrb[0].mxu0
    %511 = vmatprep.mubr.f32.mxu0 0.0
    %512 = vmatmul.mubr.f32.gmra.mrb[0].mxu0 %v252
    %v513 = vpop.f32.mrb[0].mxu0
    %v514 = vadd.f32 0.0, %v513
    %v515 = vpop.f32.mrb[0].mxu0
    %516 = vmatprep.mubr.f32.mxu0 0.0
    %517 = vmatmul.mubr.f32.gmra.mrb[0].mxu0 %v255
    %v518 = vpop.f32.mrb[0].mxu0
    %v519 = vadd.f32 0.0, %v518
    %v520 = vpop.f32.mrb[0].mxu0
    %521 = vdwg.mxu0
    %s522 = scalar_lea.vmem [#allocation5], 64
    %523 = vst.msk [vmem:[%s522] sm:$0xff] %vm342, %v504
    %524 = vst.msk [vmem:[%s522 + $0x8] sm:$0xff] %vm342, %v509
    %525 = vst.msk [vmem:[%s522 + $0x10] sm:$0xff] %vm342, %v514
    %526 = vst.msk [vmem:[%s522 + $0x18] sm:$0xff] %vm342, %v519
    %527 = vmatprep.subr.mxu0 0.0
    %528 = vmatpush1.msra.mxu0 %v197
    %529 = vmatprep.subr.mxu0 0.0
    %530 = vmatpush1.msra.mxu0 %v202
    %531 = vmatprep.subr.mxu0 0.0
    %532 = vmatpush1.msra.mxu0 0.0
    %533 = vmatprep.subr.mxu0 0.0
    %534 = vmatpush1.msra.mxu0 0.0
    %535 = vmatprep.subr.mxu0 0.0
    %536 = vmatpush1.msra.mxu0 0.0
    %537 = vmatprep.subr.mxu0 0.0
    %538 = vmatpush1.msra.mxu0 0.0
    %539 = vmatprep.subr.mxu0 0.0
    %540 = vmatpush1.msra.mxu0 0.0
    %541 = vmatprep.subr.mxu0 0.0
    %542 = vmatpush1.msra.mxu0 0.0
    %543 = vmatprep.subr.mxu0 0.0
    %544 = vmatpush1.msra.mxu0 0.0
    %545 = vmatprep.subr.mxu0 0.0
    %546 = vmatpush1.msra.mxu0 0.0
    %547 = vmatprep.subr.mxu0 0.0
    %548 = vmatpush1.msra.mxu0 0.0
    %549 = vmatprep.subr.mxu0 0.0
    %550 = vmatpush1.msra.mxu0 0.0
    %551 = vmatprep.subr.mxu0 0.0
    %552 = vmatpush1.msra.mxu0 0.0
    %553 = vmatprep.subr.mxu0 0.0
    %554 = vmatpush1.msra.mxu0 0.0
    %555 = vmatprep.subr.mxu0 0.0
    %556 = vmatpush1.msra.mxu0 0.0
    %557 = vmatprep.subr.mxu0 0.0
    %558 = vmatpush1.msra.mxu0 0.0
    %559 = vmatprep.subr.mxu0 0.0
    %560 = vmatpush1.msra.mxu0 0.0
    %561 = vmatprep.subr.mxu0 0.0
    %562 = vmatpush1.msra.mxu0 0.0
    %563 = vmatprep.subr.mxu0 0.0
    %564 = vmatpush1.msra.mxu0 0.0
    %565 = vmatprep.subr.mxu0 0.0
    %566 = vmatpush1.msra.mxu0 0.0
    %567 = vmatprep.subr.mxu0 0.0
    %568 = vmatpush1.msra.mxu0 0.0
    %569 = vmatprep.subr.mxu0 0.0
    %570 = vmatpush1.msra.mxu0 0.0
    %571 = vmatprep.subr.mxu0 0.0
    %572 = vmatpush1.msra.mxu0 0.0
    %573 = vmatprep.subr.mxu0 0.0
    %574 = vmatpush1.msra.mxu0 0.0
    %575 = vmatprep.subr.mxu0 0.0
    %576 = vmatpush1.msra.mxu0 0.0
    %577 = vmatprep.subr.mxu0 0.0
    %578 = vmatpush1.msra.mxu0 0.0
    %579 = vmatprep.subr.mxu0 0.0
    %580 = vmatpush1.msra.mxu0 0.0
    %581 = vmatprep.subr.mxu0 0.0
    %582 = vmatpush1.msra.mxu0 0.0
    %583 = vmatprep.subr.mxu0 0.0
    %584 = vmatpush1.msra.mxu0 0.0
    %585 = vmatprep.subr.mxu0 0.0
    %586 = vmatpush1.msra.mxu0 0.0
    %587 = vmatprep.subr.mxu0 0.0
    %588 = vmatpush1.msra.mxu0 0.0
    %589 = vmatprep.subr.mxu0 0.0
    %590 = vmatpush1.msra.mxu0 0.0
    %591 = vmatprep.mubr.f32.mxu0 0.0
    %592 = vmatmul.mubr.f32.gmra.mrb[0].mxu0 %v246
    %v593 = vpop.f32.mrb[0].mxu0
    %v594 = vadd.f32 0.0, %v593
    %v595 = vpop.f32.mrb[0].mxu0
    %596 = vmatprep.mubr.f32.mxu0 0.0
    %597 = vmatmul.mubr.f32.gmra.mrb[0].mxu0 %v249
    %v598 = vpop.f32.mrb[0].mxu0
    %v599 = vadd.f32 0.0, %v598
    %v600 = vpop.f32.mrb[0].mxu0
    %601 = vmatprep.mubr.f32.mxu0 0.0
    %602 = vmatmul.mubr.f32.gmra.mrb[0].mxu0 %v252
    %v603 = vpop.f32.mrb[0].mxu0
    %v604 = vadd.f32 0.0, %v603
    %v605 = vpop.f32.mrb[0].mxu0
    %606 = vmatprep.mubr.f32.mxu0 0.0
    %607 = vmatmul.mubr.f32.gmra.mrb[0].mxu0 %v255
    %v608 = vpop.f32.mrb[0].mxu0
    %v609 = vadd.f32 0.0, %v608
    %v610 = vpop.f32.mrb[0].mxu0
    %611 = vdwg.mxu0
    %s612 = scalar_lea.vmem [#allocation5], 96
    %613 = vst.msk [vmem:[%s612] sm:$0xff] %vm342, %v594
    %614 = vst.msk [vmem:[%s612 + $0x8] sm:$0xff] %vm342, %v599
    %615 = vst.msk [vmem:[%s612 + $0x10] sm:$0xff] %vm342, %v604
    %616 = vst.msk [vmem:[%s612 + $0x18] sm:$0xff] %vm342, %v609
    %617 = vmatprep.subr.mxu0 0.0
    %618 = vmatpush1.msra.mxu0 %v207
    %619 = vmatprep.subr.mxu0 0.0
    %620 = vmatpush1.msra.mxu0 %v212
    %621 = vmatprep.subr.mxu0 0.0
    %622 = vmatpush1.msra.mxu0 0.0
    %623 = vmatprep.subr.mxu0 0.0
    %624 = vmatpush1.msra.mxu0 0.0
    %625 = vmatprep.subr.mxu0 0.0
    %626 = vmatpush1.msra.mxu0 0.0
    %627 = vmatprep.subr.mxu0 0.0
    %628 = vmatpush1.msra.mxu0 0.0
    %629 = vmatprep.subr.mxu0 0.0
    %630 = vmatpush1.msra.mxu0 0.0
    %631 = vmatprep.subr.mxu0 0.0
    %632 = vmatpush1.msra.mxu0 0.0
    %633 = vmatprep.subr.mxu0 0.0
    %634 = vmatpush1.msra.mxu0 0.0
    %635 = vmatprep.subr.mxu0 0.0
    %636 = vmatpush1.msra.mxu0 0.0
    %637 = vmatprep.subr.mxu0 0.0
    %638 = vmatpush1.msra.mxu0 0.0
    %639 = vmatprep.subr.mxu0 0.0
    %640 = vmatpush1.msra.mxu0 0.0
    %641 = vmatprep.subr.mxu0 0.0
    %642 = vmatpush1.msra.mxu0 0.0
    %643 = vmatprep.subr.mxu0 0.0
    %644 = vmatpush1.msra.mxu0 0.0
    %645 = vmatprep.subr.mxu0 0.0
    %646 = vmatpush1.msra.mxu0 0.0
    %647 = vmatprep.subr.mxu0 0.0
    %648 = vmatpush1.msra.mxu0 0.0
    %649 = vmatprep.subr.mxu0 0.0
    %650 = vmatpush1.msra.mxu0 0.0
    %651 = vmatprep.subr.mxu0 0.0
    %652 = vmatpush1.msra.mxu0 0.0
    %653 = vmatprep.subr.mxu0 0.0
    %654 = vmatpush1.msra.mxu0 0.0
    %655 = vmatprep.subr.mxu0 0.0
    %656 = vmatpush1.msra.mxu0 0.0
    %657 = vmatprep.subr.mxu0 0.0
    %658 = vmatpush1.msra.mxu0 0.0
    %659 = vmatprep.subr.mxu0 0.0
    %660 = vmatpush1.msra.mxu0 0.0
    %661 = vmatprep.subr.mxu0 0.0
    %662 = vmatpush1.msra.mxu0 0.0
    %663 = vmatprep.subr.mxu0 0.0
    %664 = vmatpush1.msra.mxu0 0.0
    %665 = vmatprep.subr.mxu0 0.0
    %666 = vmatpush1.msra.mxu0 0.0
    %667 = vmatprep.subr.mxu0 0.0
    %668 = vmatpush1.msra.mxu0 0.0
    %669 = vmatprep.subr.mxu0 0.0
    %670 = vmatpush1.msra.mxu0 0.0
    %671 = vmatprep.subr.mxu0 0.0
    %672 = vmatpush1.msra.mxu0 0.0
    %673 = vmatprep.subr.mxu0 0.0
    %674 = vmatpush1.msra.mxu0 0.0
    %675 = vmatprep.subr.mxu0 0.0
    %676 = vmatpush1.msra.mxu0 0.0
    %677 = vmatprep.subr.mxu0 0.0
    %678 = vmatpush1.msra.mxu0 0.0
    %679 = vmatprep.subr.mxu0 0.0
    %680 = vmatpush1.msra.mxu0 0.0
    %681 = vmatprep.mubr.f32.mxu0 0.0
    %682 = vmatmul.mubr.f32.gmra.mrb[0].mxu0 %v246
    %v683 = vpop.f32.mrb[0].mxu0
    %v684 = vadd.f32 0.0, %v683
    %v685 = vpop.f32.mrb[0].mxu0
    %686 = vmatprep.mubr.f32.mxu0 0.0
    %687 = vmatmul.mubr.f32.gmra.mrb[0].mxu0 %v249
    %v688 = vpop.f32.mrb[0].mxu0
    %v689 = vadd.f32 0.0, %v688
    %v690 = vpop.f32.mrb[0].mxu0
    %691 = vmatprep.mubr.f32.mxu0 0.0
    %692 = vmatmul.mubr.f32.gmra.mrb[0].mxu0 %v252
    %v693 = vpop.f32.mrb[0].mxu0
    %v694 = vadd.f32 0.0, %v693
    %v695 = vpop.f32.mrb[0].mxu0
    %696 = vmatprep.mubr.f32.mxu0 0.0
    %697 = vmatmul.mubr.f32.gmra.mrb[0].mxu0 %v255
    %v698 = vpop.f32.mrb[0].mxu0
    %v699 = vadd.f32 0.0, %v698
    %v700 = vpop.f32.mrb[0].mxu0
    %701 = vdwg.mxu0
    %s702 = scalar_lea.vmem [#allocation5], 128
    %703 = vst.msk [vmem:[%s702] sm:$0xff] %vm342, %v684
    %704 = vst.msk [vmem:[%s702 + $0x8] sm:$0xff] %vm342, %v689
    %705 = vst.msk [vmem:[%s702 + $0x10] sm:$0xff] %vm342, %v694
    %706 = vst.msk [vmem:[%s702 + $0x18] sm:$0xff] %vm342, %v699
    %707 = vmatprep.subr.mxu0 0.0
    %708 = vmatpush1.msra.mxu0 %v217
    %709 = vmatprep.subr.mxu0 0.0
    %710 = vmatpush1.msra.mxu0 %v222
    %711 = vmatprep.subr.mxu0 0.0
    %712 = vmatpush1.msra.mxu0 0.0
    %713 = vmatprep.subr.mxu0 0.0
    %714 = vmatpush1.msra.mxu0 0.0
    %715 = vmatprep.subr.mxu0 0.0
    %716 = vmatpush1.msra.mxu0 0.0
    %717 = vmatprep.subr.mxu0 0.0
    %718 = vmatpush1.msra.mxu0 0.0
    %719 = vmatprep.subr.mxu0 0.0
    %720 = vmatpush1.msra.mxu0 0.0
    %721 = vmatprep.subr.mxu0 0.0
    %722 = vmatpush1.msra.mxu0 0.0
    %723 = vmatprep.subr.mxu0 0.0
    %724 = vmatpush1.msra.mxu0 0.0
    %725 = vmatprep.subr.mxu0 0.0
    %726 = vmatpush1.msra.mxu0 0.0
    %727 = vmatprep.subr.mxu0 0.0
    %728 = vmatpush1.msra.mxu0 0.0
    %729 = vmatprep.subr.mxu0 0.0
    %730 = vmatpush1.msra.mxu0 0.0
    %731 = vmatprep.subr.mxu0 0.0
    %732 = vmatpush1.msra.mxu0 0.0
    %733 = vmatprep.subr.mxu0 0.0
    %734 = vmatpush1.msra.mxu0 0.0
    %735 = vmatprep.subr.mxu0 0.0
    %736 = vmatpush1.msra.mxu0 0.0
    %737 = vmatprep.subr.mxu0 0.0
    %738 = vmatpush1.msra.mxu0 0.0
    %739 = vmatprep.subr.mxu0 0.0
    %740 = vmatpush1.msra.mxu0 0.0
    %741 = vmatprep.subr.mxu0 0.0
    %742 = vmatpush1.msra.mxu0 0.0
    %743 = vmatprep.subr.mxu0 0.0
    %744 = vmatpush1.msra.mxu0 0.0
    %745 = vmatprep.subr.mxu0 0.0
    %746 = vmatpush1.msra.mxu0 0.0
    %747 = vmatprep.subr.mxu0 0.0
    %748 = vmatpush1.msra.mxu0 0.0
    %749 = vmatprep.subr.mxu0 0.0
    %750 = vmatpush1.msra.mxu0 0.0
    %751 = vmatprep.subr.mxu0 0.0
    %752 = vmatpush1.msra.mxu0 0.0
    %753 = vmatprep.subr.mxu0 0.0
    %754 = vmatpush1.msra.mxu0 0.0
    %755 = vmatprep.subr.mxu0 0.0
    %756 = vmatpush1.msra.mxu0 0.0
    %757 = vmatprep.subr.mxu0 0.0
    %758 = vmatpush1.msra.mxu0 0.0
    %759 = vmatprep.subr.mxu0 0.0
    %760 = vmatpush1.msra.mxu0 0.0
    %761 = vmatprep.subr.mxu0 0.0
    %762 = vmatpush1.msra.mxu0 0.0
    %763 = vmatprep.subr.mxu0 0.0
    %764 = vmatpush1.msra.mxu0 0.0
    %765 = vmatprep.subr.mxu0 0.0
    %766 = vmatpush1.msra.mxu0 0.0
    %767 = vmatprep.subr.mxu0 0.0
    %768 = vmatpush1.msra.mxu0 0.0
    %769 = vmatprep.subr.mxu0 0.0
    %770 = vmatpush1.msra.mxu0 0.0
    %771 = vmatprep.mubr.f32.mxu0 0.0
    %772 = vmatmul.mubr.f32.gmra.mrb[0].mxu0 %v246
    %v773 = vpop.f32.mrb[0].mxu0
    %v774 = vadd.f32 0.0, %v773
    %v775 = vpop.f32.mrb[0].mxu0
    %776 = vmatprep.mubr.f32.mxu0 0.0
    %777 = vmatmul.mubr.f32.gmra.mrb[0].mxu0 %v249
    %v778 = vpop.f32.mrb[0].mxu0
    %v779 = vadd.f32 0.0, %v778
    %v780 = vpop.f32.mrb[0].mxu0
    %781 = vmatprep.mubr.f32.mxu0 0.0
    %782 = vmatmul.mubr.f32.gmra.mrb[0].mxu0 %v252
    %v783 = vpop.f32.mrb[0].mxu0
    %v784 = vadd.f32 0.0, %v783
    %v785 = vpop.f32.mrb[0].mxu0
    %786 = vmatprep.mubr.f32.mxu0 0.0
    %787 = vmatmul.mubr.f32.gmra.mrb[0].mxu0 %v255
    %v788 = vpop.f32.mrb[0].mxu0
    %v789 = vadd.f32 0.0, %v788
    %v790 = vpop.f32.mrb[0].mxu0
    %791 = vdwg.mxu0
    %s792 = scalar_lea.vmem [#allocation5], 160
    %793 = vst.msk [vmem:[%s792] sm:$0xff] %vm342, %v774
    %794 = vst.msk [vmem:[%s792 + $0x8] sm:$0xff] %vm342, %v779
    %795 = vst.msk [vmem:[%s792 + $0x10] sm:$0xff] %vm342, %v784
    %796 = vst.msk [vmem:[%s792 + $0x18] sm:$0xff] %vm342, %v789
    %797 = vmatprep.subr.mxu0 0.0
    %798 = vmatpush1.msra.mxu0 %v227
    %799 = vmatprep.subr.mxu0 0.0
    %800 = vmatpush1.msra.mxu0 %v232
    %801 = vmatprep.subr.mxu0 0.0
    %802 = vmatpush1.msra.mxu0 0.0
    %803 = vmatprep.subr.mxu0 0.0
    %804 = vmatpush1.msra.mxu0 0.0
    %805 = vmatprep.subr.mxu0 0.0
    %806 = vmatpush1.msra.mxu0 0.0
    %807 = vmatprep.subr.mxu0 0.0
    %808 = vmatpush1.msra.mxu0 0.0
    %809 = vmatprep.subr.mxu0 0.0
    %810 = vmatpush1.msra.mxu0 0.0
    %811 = vmatprep.subr.mxu0 0.0
    %812 = vmatpush1.msra.mxu0 0.0
    %813 = vmatprep.subr.mxu0 0.0
    %814 = vmatpush1.msra.mxu0 0.0
    %815 = vmatprep.subr.mxu0 0.0
    %816 = vmatpush1.msra.mxu0 0.0
    %817 = vmatprep.subr.mxu0 0.0
    %818 = vmatpush1.msra.mxu0 0.0
    %819 = vmatprep.subr.mxu0 0.0
    %820 = vmatpush1.msra.mxu0 0.0
    %821 = vmatprep.subr.mxu0 0.0
    %822 = vmatpush1.msra.mxu0 0.0
    %823 = vmatprep.subr.mxu0 0.0
    %824 = vmatpush1.msra.mxu0 0.0
    %825 = vmatprep.subr.mxu0 0.0
    %826 = vmatpush1.msra.mxu0 0.0
    %827 = vmatprep.subr.mxu0 0.0
    %828 = vmatpush1.msra.mxu0 0.0
    %829 = vmatprep.subr.mxu0 0.0
    %830 = vmatpush1.msra.mxu0 0.0
    %831 = vmatprep.subr.mxu0 0.0
    %832 = vmatpush1.msra.mxu0 0.0
    %833 = vmatprep.subr.mxu0 0.0
    %834 = vmatpush1.msra.mxu0 0.0
    %835 = vmatprep.subr.mxu0 0.0
    %836 = vmatpush1.msra.mxu0 0.0
    %837 = vmatprep.subr.mxu0 0.0
    %838 = vmatpush1.msra.mxu0 0.0
    %839 = vmatprep.subr.mxu0 0.0
    %840 = vmatpush1.msra.mxu0 0.0
    %841 = vmatprep.subr.mxu0 0.0
    %842 = vmatpush1.msra.mxu0 0.0
    %843 = vmatprep.subr.mxu0 0.0
    %844 = vmatpush1.msra.mxu0 0.0
    %845 = vmatprep.subr.mxu0 0.0
    %846 = vmatpush1.msra.mxu0 0.0
    %847 = vmatprep.subr.mxu0 0.0
    %848 = vmatpush1.msra.mxu0 0.0
    %849 = vmatprep.subr.mxu0 0.0
    %850 = vmatpush1.msra.mxu0 0.0
    %851 = vmatprep.subr.mxu0 0.0
    %852 = vmatpush1.msra.mxu0 0.0
    %853 = vmatprep.subr.mxu0 0.0
    %854 = vmatpush1.msra.mxu0 0.0
    %855 = vmatprep.subr.mxu0 0.0
    %856 = vmatpush1.msra.mxu0 0.0
    %857 = vmatprep.subr.mxu0 0.0
    %858 = vmatpush1.msra.mxu0 0.0
    %859 = vmatprep.subr.mxu0 0.0
    %860 = vmatpush1.msra.mxu0 0.0
    %861 = vmatprep.mubr.f32.mxu0 0.0
    %862 = vmatmul.mubr.f32.gmra.mrb[0].mxu0 %v246
    %v863 = vpop.f32.mrb[0].mxu0
    %v864 = vadd.f32 0.0, %v863
    %v865 = vpop.f32.mrb[0].mxu0
    %866 = vmatprep.mubr.f32.mxu0 0.0
    %867 = vmatmul.mubr.f32.gmra.mrb[0].mxu0 %v249
    %v868 = vpop.f32.mrb[0].mxu0
    %v869 = vadd.f32 0.0, %v868
    %v870 = vpop.f32.mrb[0].mxu0
    %871 = vmatprep.mubr.f32.mxu0 0.0
    %872 = vmatmul.mubr.f32.gmra.mrb[0].mxu0 %v252
    %v873 = vpop.f32.mrb[0].mxu0
    %v874 = vadd.f32 0.0, %v873
    %v875 = vpop.f32.mrb[0].mxu0
    %876 = vmatprep.mubr.f32.mxu0 0.0
    %877 = vmatmul.mubr.f32.gmra.mrb[0].mxu0 %v255
    %v878 = vpop.f32.mrb[0].mxu0
    %v879 = vadd.f32 0.0, %v878
    %v880 = vpop.f32.mrb[0].mxu0
    %881 = vdwg.mxu0
    %s882 = scalar_lea.vmem [#allocation5], 192
    %883 = vst.msk [vmem:[%s882] sm:$0xff] %vm342, %v864
    %884 = vst.msk [vmem:[%s882 + $0x8] sm:$0xff] %vm342, %v869
    %885 = vst.msk [vmem:[%s882 + $0x10] sm:$0xff] %vm342, %v874
    %886 = vst.msk [vmem:[%s882 + $0x18] sm:$0xff] %vm342, %v879
    %887 = vmatprep.subr.mxu0 0.0
    %888 = vmatpush1.msra.mxu0 %v237
    %889 = vmatprep.subr.mxu0 0.0
    %890 = vmatpush1.msra.mxu0 %v242
    %891 = vmatprep.subr.mxu0 0.0
    %892 = vmatpush1.msra.mxu0 0.0
    %893 = vmatprep.subr.mxu0 0.0
    %894 = vmatpush1.msra.mxu0 0.0
    %895 = vmatprep.subr.mxu0 0.0
    %896 = vmatpush1.msra.mxu0 0.0
    %897 = vmatprep.subr.mxu0 0.0
    %898 = vmatpush1.msra.mxu0 0.0
    %899 = vmatprep.subr.mxu0 0.0
    %900 = vmatpush1.msra.mxu0 0.0
    %901 = vmatprep.subr.mxu0 0.0
    %902 = vmatpush1.msra.mxu0 0.0
    %903 = vmatprep.subr.mxu0 0.0
    %904 = vmatpush1.msra.mxu0 0.0
    %905 = vmatprep.subr.mxu0 0.0
    %906 = vmatpush1.msra.mxu0 0.0
    %907 = vmatprep.subr.mxu0 0.0
    %908 = vmatpush1.msra.mxu0 0.0
    %909 = vmatprep.subr.mxu0 0.0
    %910 = vmatpush1.msra.mxu0 0.0
    %911 = vmatprep.subr.mxu0 0.0
    %912 = vmatpush1.msra.mxu0 0.0
    %913 = vmatprep.subr.mxu0 0.0
    %914 = vmatpush1.msra.mxu0 0.0
    %915 = vmatprep.subr.mxu0 0.0
    %916 = vmatpush1.msra.mxu0 0.0
    %917 = vmatprep.subr.mxu0 0.0
    %918 = vmatpush1.msra.mxu0 0.0
    %919 = vmatprep.subr.mxu0 0.0
    %920 = vmatpush1.msra.mxu0 0.0
    %921 = vmatprep.subr.mxu0 0.0
    %922 = vmatpush1.msra.mxu0 0.0
    %923 = vmatprep.subr.mxu0 0.0
    %924 = vmatpush1.msra.mxu0 0.0
    %925 = vmatprep.subr.mxu0 0.0
    %926 = vmatpush1.msra.mxu0 0.0
    %927 = vmatprep.subr.mxu0 0.0
    %928 = vmatpush1.msra.mxu0 0.0
    %929 = vmatprep.subr.mxu0 0.0
    %930 = vmatpush1.msra.mxu0 0.0
    %931 = vmatprep.subr.mxu0 0.0
    %932 = vmatpush1.msra.mxu0 0.0
    %933 = vmatprep.subr.mxu0 0.0
    %934 = vmatpush1.msra.mxu0 0.0
    %935 = vmatprep.subr.mxu0 0.0
    %936 = vmatpush1.msra.mxu0 0.0
    %937 = vmatprep.subr.mxu0 0.0
    %938 = vmatpush1.msra.mxu0 0.0
    %939 = vmatprep.subr.mxu0 0.0
    %940 = vmatpush1.msra.mxu0 0.0
    %941 = vmatprep.subr.mxu0 0.0
    %942 = vmatpush1.msra.mxu0 0.0
    %943 = vmatprep.subr.mxu0 0.0
    %944 = vmatpush1.msra.mxu0 0.0
    %945 = vmatprep.subr.mxu0 0.0
    %946 = vmatpush1.msra.mxu0 0.0
    %947 = vmatprep.subr.mxu0 0.0
    %948 = vmatpush1.msra.mxu0 0.0
    %949 = vmatprep.subr.mxu0 0.0
    %950 = vmatpush1.msra.mxu0 0.0
    %951 = vmatprep.mubr.f32.mxu0 0.0
    %952 = vmatmul.mubr.f32.gmra.mrb[0].mxu0 %v246
    %v953 = vpop.f32.mrb[0].mxu0
    %v954 = vadd.f32 0.0, %v953
    %v955 = vpop.f32.mrb[0].mxu0
    %956 = vmatprep.mubr.f32.mxu0 0.0
    %957 = vmatmul.mubr.f32.gmra.mrb[0].mxu0 %v249
    %v958 = vpop.f32.mrb[0].mxu0
    %v959 = vadd.f32 0.0, %v958
    %v960 = vpop.f32.mrb[0].mxu0
    %961 = vmatprep.mubr.f32.mxu0 0.0
    %962 = vmatmul.mubr.f32.gmra.mrb[0].mxu0 %v252
    %v963 = vpop.f32.mrb[0].mxu0
    %v964 = vadd.f32 0.0, %v963
    %v965 = vpop.f32.mrb[0].mxu0
    %966 = vmatprep.mubr.f32.mxu0 0.0
    %967 = vmatmul.mubr.f32.gmra.mrb[0].mxu0 %v255
    %v968 = vpop.f32.mrb[0].mxu0
    %v969 = vadd.f32 0.0, %v968
    %v970 = vpop.f32.mrb[0].mxu0
    %971 = vdwg.mxu0
    %s972 = scalar_lea.vmem [#allocation5], 224
    %973 = vst.msk [vmem:[%s972] sm:$0xff] %vm342, %v954
    %974 = vst.msk [vmem:[%s972 + $0x8] sm:$0xff] %vm342, %v959
    %975 = vst.msk [vmem:[%s972 + $0x10] sm:$0xff] %vm342, %v964
    %976 = vst.msk [vmem:[%s972 + $0x18] sm:$0xff] %vm342, %v969
    // Predicated region
    $region18: #{tpu_custom_call.1} parent=1 // pred_check
      _
    $region19: #{tpu_custom_call.1} parent=1 // pred_check_branch
      %978 = sbr.rel (0) target = $region21
    $region20: #{tpu_custom_call.1} parent=1 // pred_region
      %s980 = ssub.s32 4096, 4096
      %981 = vsyncadd [#allocation4], %s980
      %s982 = sshll.u32 [#allocation5], 4
      %s983 = int_to_ptr.vmem [resolvable:$true] %s982
      %988 = dma.vmem_to_hbm [thread:$0]  %s983, 4096, %s3, [#allocation4], 128, 128, 8
    $region21: #{tpu_custom_call.1} parent=1 // pred_fallthru
      _
    // Predicated region
    $region22: #{tpu_custom_call.1} parent=1 // pred_check
      _
    $region23: #{tpu_custom_call.1} parent=1 // pred_check_branch
      %990 = sbr.rel (0) target = $region25
    $region24: #{tpu_custom_call.1} parent=1 // pred_region
      %991 = dma.done [#allocation4], 4096
    $region25: #{tpu_custom_call.1} parent=1 // pred_fallthru
      _
    %992 = vsyncpa [#allocation3], 1
    %993 = vsyncpa [#allocation4], 1

</llo_original>
